<compile_context>
chip_gen: v7x
topology: tpu7x:2x2x1
jax: 0.10.0
libtpu: 0.0.40
codegen_flags: <defaults>
</compile_context>

<pallas_src>
import functools

import jax
import jax.numpy as jnp
from jax.experimental import pallas as pl
from jax.experimental.pallas import tpu as pltpu


def _round_up(x, m):
    return -(-x // m) * m


@functools.lru_cache(maxsize=None)
def _vmem_limit_bytes():
    """~3/4 of physical VMEM per generation (96 MiB v5e/v6e, 48 MiB v7x)."""
    cap = 64 * 1024 * 1024
    try:
        info = pltpu.get_tpu_info()
        cap = int(getattr(info, "vmem_capacity_bytes", cap) or cap)
    except Exception:
        pass
    return min((cap * 3) // 4, 100 * 1024 * 1024)


# ----------------------------------------------------------------------------
# Kernel 1: qkv Conv1d as a channel-first matmul + bias over L tiles
# ----------------------------------------------------------------------------
def _qkv_conv_kernel(x_ref, w_ref, b_ref, o_ref):
    # x: (1, K, tl), w: (cout, K), b: (cout, 1) f32 -> o: (1, cout, tl)
    acc = jnp.dot(w_ref[...], x_ref[0], preferred_element_type=jnp.float32)
    o_ref[0] = (acc + b_ref[...]).astype(o_ref.dtype)


def qkv_conv1d(x_ncl, w, b, *, kernel_size, stride, compute_dtype, tile_l=512):
    """Conv1d ('same' padding) channel-first: (N, C_in, L_in) -> (N, cout, L_out)."""
    N, C_in, L_in = x_ncl.shape
    cout = w.shape[0]
    pad = (kernel_size - 1) // 2
    L_out = (L_in + 2 * pad - kernel_size) // stride + 1
    K = C_in * kernel_size

    # im2col from ks static shifted slices (no gather), kept channel-first so the matmul
    # output is already (N, cout, L) with L on the lane axis.
    # TODO(synk): fold the ks taps into the Pallas matmul (shifted-window accumulation)
    #             to avoid materializing the ks-times-larger patch array in HBM.
    x_pad = jnp.pad(x_ncl, ((0, 0), (0, 0), (pad, pad)))
    span = (L_out - 1) * stride + 1
    cols = [x_pad[:, :, t:t + span:stride] for t in range(kernel_size)]
    patches = jnp.stack(cols, axis=2).reshape(N, K, L_out).astype(compute_dtype)

    w_flat = w.reshape(cout, K).astype(compute_dtype)       # (cout, C_in*ks), c-major/t-minor
    b_col = b.reshape(cout, 1).astype(jnp.float32)

    tl = L_out
    if L_out > tile_l:
        for c in (512, 384, 256, 128):
            if c <= tile_l and L_out % c == 0:
                tl = c
                break
    grid = (N, L_out // tl)

    in_item = jnp.dtype(compute_dtype).itemsize
    cost = pl.CostEstimate(
        flops=2 * N * L_out * K * cout,
        transcendentals=0,
        bytes_accessed=(N * K * L_out * in_item + cout * K * in_item
                       + cout * 4 + N * cout * L_out * in_item),
    )
    return pl.pallas_call(
        _qkv_conv_kernel,
        out_shape=jax.ShapeDtypeStruct((N, cout, L_out), compute_dtype),
        grid=grid,
        in_specs=[
            pl.BlockSpec((1, K, tl), lambda n, j: (n, 0, j)),   # pipelined L tiles
            pl.BlockSpec((cout, K), lambda n, j: (0, 0)),       # weights resident
            pl.BlockSpec((cout, 1), lambda n, j: (0, 0)),       # bias resident
        ],
        out_specs=pl.BlockSpec((1, cout, tl), lambda n, j: (n, 0, j)),
        compiler_params=pltpu.CompilerParams(
            dimension_semantics=("parallel", "parallel"),
            vmem_limit_bytes=_vmem_limit_bytes()),
        cost_estimate=cost,
    )(patches, w_flat, b_col)


# ----------------------------------------------------------------------------
# Kernel 2: multi-head attention + fused 1x1 output conv, one (batch, q-tile)/step
# ----------------------------------------------------------------------------
def _attn_proj_kernel(q_ref, k_ref, v_ref, w_ref, b_ref, o_ref, *,
                      Nh, dvh, single_head, approx_recip):
    # q: (1, Nh, dkh, tq)  k: (1, Nh, dkh, L)  v: (1, Nh, dvh, L)
    # w: (Nh, dv, dvh)     b: (dv, 1) f32      o: (1, dv, tq)
    out_t = None
    for h in range(Nh):                                        # static unroll over heads
        qh = q_ref[0, h, :, :]                                 # (dkh, tq)   q pre-scaled
        kh = k_ref[0, h, :, :]                                 # (dkh, L)
        vh = v_ref[0, h, :, :]                                 # (dvh, L)

        # logits_T[k, q] = <k_k, q_q>;  L_q stays on the lane axis throughout.
        logits_t = jax.lax.dot_general(
            kh, qh, (((0,), (0,)), ((), ())),
            preferred_element_type=jnp.float32)                # (L, tq) f32
        m_t = jnp.max(logits_t, axis=0, keepdims=True)         # (1, tq)
        p_t = jnp.exp(logits_t - m_t)                          # (L, tq) f32
        l_t = jnp.sum(p_t, axis=0, keepdims=True)              # (1, tq)

        # oh_T[d, q] = sum_k v[d, k] * p_T[k, q]; softmax normalization deferred past
        # the PV matmul (normalize dvh*tq elements instead of L*tq).
        oh_t = jnp.dot(vh, p_t.astype(vh.dtype),
                       preferred_element_type=jnp.float32)     # (dvh, tq) f32
        oh_t = oh_t * pl.reciprocal(l_t, approx=approx_recip)

        if single_head:
            # Identity out-proj: write this head's channel slab directly (exact in f32).
            o_ref[0, pl.ds(h * dvh, dvh), :] = oh_t.astype(o_ref.dtype)
        else:
            # Fused 1x1 out-conv, folded per head: out += W[:, h*dvh:(h+1)*dvh] @ oh.
            contrib = jnp.dot(w_ref[h, :, :], oh_t.astype(w_ref.dtype),
                              preferred_element_type=jnp.float32)  # (dv, tq)
            out_t = contrib if out_t is None else out_t + contrib

    if not single_head:
        o_ref[0, :, :] = (out_t + b_ref[...]).astype(o_ref.dtype)


def attention_out(q, k, v, w_out, b_out, *, dv, single_head, compute_dtype,
                  out_dtype=jnp.float32):
    """q/k: (N, Nh, dkh, L), v: (N, Nh, dvh, L) -> (N, dv, L) in out_dtype."""
    N, Nh, dkh, L = q.shape
    dvh = v.shape[2]
    in_item = jnp.dtype(compute_dtype).itemsize
    out_item = jnp.dtype(out_dtype).itemsize

    # Dense-path VMEM budget: double-buffered inputs/outputs + f32 logits/exp/accumulators.
    p8 = lambda x: _round_up(max(x, 1), 8)
    p128 = lambda x: _round_up(max(x, 1), 128)

    def step_bytes(tq):
        qb = Nh * p8(dkh) * p128(tq) * in_item
        kb = Nh * p8(dkh) * p128(L) * in_item
        vb = Nh * p8(dvh) * p128(L) * in_item
        wb = Nh * p8(dv) * p128(dvh) * in_item + p8(dv) * 128 * 4
        ob = p8(dv) * p128(tq) * out_item
        io = 2 * (qb + kb + vb + wb + ob)                     # pipeline double-buffers
        work = (2 * p8(L) + p8(dvh) + p8(dv)) * p128(tq) * 4  # logits + p + oh + out acc
        return io + work

    budget = (_vmem_limit_bytes() * 7) // 10
    if L <= 512:
        cands = [L]
    else:
        cands = [c for c in (512, 384, 256, 128) if L % c == 0] + [L]
    tq = next((c for c in cands if step_bytes(c) <= budget), None)
    if tq is None:
        # TODO(synk): flash / KV-tiled online-softmax variant for very long sequences
        #             (K and V are currently loaded in full per batch item).
        raise NotImplementedError(
            f"dense attention path exceeds the VMEM budget for L={L}")

    if single_head:
        w_heads = jnp.zeros((Nh, dv, dvh), compute_dtype)     # unused placeholder
        b_col = jnp.zeros((dv, 1), jnp.float32)
    else:
        w_mat = w_out.reshape(dv, dv)                          # (dv_out, dv_in)
        w_heads = w_mat.reshape(dv, Nh, dvh).transpose(1, 0, 2).astype(compute_dtype)
        b_col = b_out.reshape(dv, 1).astype(jnp.float32)

    kernel = functools.partial(
        _attn_proj_kernel, Nh=Nh, dvh=dvh, single_head=single_head,
        approx_recip=(jnp.dtype(compute_dtype) != jnp.dtype(jnp.float32)))

    flops = N * Nh * (2 * L * L * dkh + 2 * L * L * dvh)
    if not single_head:
        flops += N * 2 * L * dv * dv
    cost = pl.CostEstimate(
        flops=flops,
        transcendentals=N * Nh * L * L,
        bytes_accessed=(N * L * Nh * (2 * dkh + dvh) * in_item
                        + N * dv * L * out_item + Nh * dv * dvh * in_item + dv * 4),
    )

    return pl.pallas_call(
        kernel,
        out_shape=jax.ShapeDtypeStruct((N, dv, L), out_dtype),
        grid=(N, L // tq),
        in_specs=[
            pl.BlockSpec((1, Nh, dkh, tq), lambda n, j: (n, 0, 0, j)),  # q tile
            pl.BlockSpec((1, Nh, dkh, L), lambda n, j: (n, 0, 0, 0)),   # K full (resident per n)
            pl.BlockSpec((1, Nh, dvh, L), lambda n, j: (n, 0, 0, 0)),   # V full (resident per n)
            pl.BlockSpec((Nh, dv, dvh), lambda n, j: (0, 0, 0)),        # out-proj weight resident
            pl.BlockSpec((dv, 1), lambda n, j: (0, 0)),                 # out-proj bias resident
        ],
        out_specs=pl.BlockSpec((1, dv, tq), lambda n, j: (n, 0, j)),
        compiler_params=pltpu.CompilerParams(
            dimension_semantics=("parallel", "parallel"),
            vmem_limit_bytes=_vmem_limit_bytes()),
        cost_estimate=cost,
    )(q, k, v, w_heads, b_col)


# ----------------------------------------------------------------------------
# Module forward (thin XLA glue, hot paths in Pallas)
# ----------------------------------------------------------------------------
def m_pos_attention_1d(x_ncl, params, *, dk, dv, Nh, kernel_size, stride=1,
                       single_head=False, compute_dtype=jnp.float32,
                       out_dtype=jnp.float32):
    """x_ncl: (N, in_channels, L) -> (N, dv, L_out).

    compute_dtype=jnp.bfloat16 feeds the MXU bf16 inputs (f32 accumulation) and is the
    recommended fast path on v5e/v6e/v7x; the f32 default keeps full precision.
    """
    assert Nh >= 1 and dk % Nh == 0 and dv % Nh == 0
    assert stride in (1, 2)
    dkh = dk // Nh

    # Fold the 1/sqrt(dkh) q-scale into the qkv conv weights/bias (free at trace time).
    scale = float(dkh) ** (-0.5)
    w_qkv = params["w_qkv"].astype(jnp.float32).at[:dk].multiply(scale)
    b_qkv = params["b_qkv"].astype(jnp.float32).at[:dk].multiply(scale)

    qkv = qkv_conv1d(x_ncl, w_qkv, b_qkv, kernel_size=kernel_size, stride=stride,
                     compute_dtype=compute_dtype)            # (N, 2*dk+dv, L) channel-first
    N, _, L = qkv.shape

    # Head split: contiguous channel slices + free reshapes (no transposes);
    # heads end up on a major axis so the kernel never lane-slices.
    q = qkv[:, :dk, :].reshape(N, Nh, dk // Nh, L)
    k = qkv[:, dk:2 * dk, :].reshape(N, Nh, dk // Nh, L)
    v = qkv[:, 2 * dk:, :].reshape(N, Nh, dv // Nh, L)

    return attention_out(q, k, v, params.get("w_out"), params.get("b_out"),
                         dv=dv, single_head=single_head,
                         compute_dtype=compute_dtype, out_dtype=out_dtype)


# ----------------------------------------------------------------------------
# Pure-JAX reference (mirrors the PyTorch forward) for correctness checks
# ----------------------------------------------------------------------------
def reference(x_ncl, params, *, dk, dv, Nh, kernel_size, stride=1, single_head=False):
    pad = (kernel_size - 1) // 2
    dkh, dvh = dk // Nh, dv // Nh
    qkv = jax.lax.conv_general_dilated(
        x_ncl, params["w_qkv"], window_strides=(stride,), padding=[(pad, pad)],
        dimension_numbers=("NCH", "OIH", "NCH"))
    qkv = qkv + params["b_qkv"][None, :, None]
    N, _, L = qkv.shape
    q, k, v = qkv[:, :dk], qkv[:, dk:2 * dk], qkv[:, 2 * dk:]
    q = q * float(dkh) ** (-0.5)
    fq = q.reshape(N, Nh, dkh, L)
    fk = k.reshape(N, Nh, dkh, L)
    fv = v.reshape(N, Nh, dvh, L)
    logits = jnp.einsum("nhdl,nhdm->nhlm", fq, fk)
    w = jax.nn.softmax(logits, axis=-1)
    oh = jnp.einsum("nhlm,nhdm->nhld", w, fv)        # (N, Nh, L, dvh)
    oh = jnp.transpose(oh, (0, 1, 3, 2))             # (N, Nh, dvh, L)
    o_all = oh.reshape(N, dv, L)
    if single_head:
        return o_all
    out = jax.lax.conv_general_dilated(
        o_all, params["w_out"], window_strides=(1,), padding=[(0, 0)],
        dimension_numbers=("NCH", "OIH", "NCH"))
    return out + params["b_out"][None, :, None]


if __name__ == "__main__":
    # Module hyper-parameters (small, consistent with the module's asserts)
    N, C_in, L = 2, 4, 16
    kernel_size = 3
    dk, dv, Nh = 8, 8, 2

    key = jax.random.PRNGKey(0)
    k0, k1, k2, k3, k4 = jax.random.split(key, 5)
    cout = 2 * dk + dv
    params = {
        "w_qkv": 0.1 * jax.random.normal(k0, (cout, C_in, kernel_size), jnp.float32),
        "b_qkv": 0.1 * jax.random.normal(k1, (cout,), jnp.float32),
        "w_out": 0.1 * jax.random.normal(k2, (dv, dv, 1), jnp.float32),
        "b_out": 0.1 * jax.random.normal(k3, (dv,), jnp.float32),
    }
    x = jax.random.normal(k4, (N, C_in, L), jnp.float32)

    # --- multi-head, stride 1, f32 (strict correctness) ---
    ref = jax.block_until_ready(reference(
        x, params, dk=dk, dv=dv, Nh=Nh, kernel_size=kernel_size,
        stride=1, single_head=False))
    out = jax.block_until_ready(m_pos_attention_1d(
        x, params, dk=dk, dv=dv, Nh=Nh, kernel_size=kernel_size, stride=1,
        single_head=False, compute_dtype=jnp.float32))
    assert out.shape == ref.shape == (N, dv, L), (out.shape, ref.shape)
    assert jnp.allclose(out, ref, atol=1e-4, rtol=1e-4), \
        f"f32 max abs err {jnp.max(jnp.abs(out - ref))}"

    # --- same config, bf16 MXU inputs (recommended fast path), relaxed tolerance ---
    out_bf16 = jax.block_until_ready(m_pos_attention_1d(
        x, params, dk=dk, dv=dv, Nh=Nh, kernel_size=kernel_size, stride=1,
        single_head=False, compute_dtype=jnp.bfloat16))
    assert out_bf16.shape == (N, dv, L), out_bf16.shape
    assert jnp.allclose(out_bf16, ref, atol=1e-1, rtol=1e-1), \
        f"bf16 max abs err {jnp.max(jnp.abs(out_bf16 - ref))}"

    # --- single-head (Identity out-proj), stride 2, f32 ---
    ref_sh = jax.block_until_ready(reference(
        x, params, dk=dk, dv=dv, Nh=Nh, kernel_size=kernel_size,
        stride=2, single_head=True))
    out_sh = jax.block_until_ready(m_pos_attention_1d(
        x, params, dk=dk, dv=dv, Nh=Nh, kernel_size=kernel_size, stride=2,
        single_head=True, compute_dtype=jnp.float32))
    assert out_sh.shape == ref_sh.shape, (out_sh.shape, ref_sh.shape)
    assert jnp.allclose(out_sh, ref_sh, atol=1e-4, rtol=1e-4), \
        f"single-head max abs err {jnp.max(jnp.abs(out_sh - ref_sh))}"

    print("KERNEL_OK")
</pallas_src>

<mosaic_0001>
module attributes {stable_mosaic.version = 11 : i64} {
  func.func @_qkv_conv_kernel(%arg0: i32, %arg1: i32, %arg2: memref<1x12x16xf32, #tpu.memory_space<vmem>>, %arg3: memref<24x12xf32, #tpu.memory_space<vmem>>, %arg4: memref<24x1xf32, #tpu.memory_space<vmem>>, %arg5: memref<1x24x16xf32, #tpu.memory_space<vmem>>) attributes {dimension_semantics = [#tpu.dimension_semantics<parallel>, #tpu.dimension_semantics<parallel>], iteration_bounds = array<i64: 2, 1>, scalar_prefetch = 0 : i64, scratch_operands = 0 : i64, tpu.core_type = #tpu.core_type<tc>, window_params = [{transform_indices = @transform_0, window_bounds = array<i64: 1, 12, 16>}, {pipeline_mode = #tpu.pipeline_mode<synchronous>, transform_indices = @transform_1, window_bounds = array<i64: 24, 12>}, {pipeline_mode = #tpu.pipeline_mode<synchronous>, transform_indices = @transform_2, window_bounds = array<i64: 24, 1>}, {transform_indices = @transform_3, window_bounds = array<i64: 1, 24, 16>}]} {
    %c0 = arith.constant 0 : index
    %c0_0 = arith.constant 0 : index
    %0 = vector.load %arg3[%c0, %c0_0] : memref<24x12xf32, #tpu.memory_space<vmem>>, vector<24x12xf32>
    %c0_1 = arith.constant 0 : index
    %c0_2 = arith.constant 0 : index
    %c0_3 = arith.constant 0 : index
    %1 = vector.load %arg2[%c0_1, %c0_2, %c0_3] : memref<1x12x16xf32, #tpu.memory_space<vmem>>, vector<1x12x16xf32>
    %2 = vector.shape_cast %1 : vector<1x12x16xf32> to vector<12x16xf32>
    %cst = arith.constant dense<0.000000e+00> : vector<24x16xf32>
    %3 = tpu.matmul %0, %2, %cst {dimension_numbers = #tpu.dot_dimension_numbers<[1], [0], [0], [1], [0, 0, 1, 1], [], []>} : vector<24x12xf32>, vector<12x16xf32>, vector<24x16xf32> -> vector<24x16xf32>
    %c0_4 = arith.constant 0 : index
    %c0_5 = arith.constant 0 : index
    %4 = vector.load %arg4[%c0_4, %c0_5] : memref<24x1xf32, #tpu.memory_space<vmem>>, vector<24x1xf32>
    %5 = vector.broadcast %4 : vector<24x1xf32> to vector<24x16xf32>
    %6 = arith.addf %3, %5 : vector<24x16xf32>
    %c0_6 = arith.constant 0 : index
    %c0_7 = arith.constant 0 : index
    %c0_8 = arith.constant 0 : index
    %7 = vector.load %arg5[%c0_6, %c0_7, %c0_8] : memref<1x24x16xf32, #tpu.memory_space<vmem>>, vector<1x24x16xf32>
    %8 = vector.shape_cast %7 : vector<1x24x16xf32> to vector<24x16xf32>
    %9 = vector.shape_cast %6 : vector<24x16xf32> to vector<1x24x16xf32>
    tpu.vector_store %arg5[%c0_6, %c0_7, %c0_8], %9 {strides = array<i32>} : memref<1x24x16xf32, #tpu.memory_space<vmem>>, vector<1x24x16xf32>,
    return
  }
  func.func @transform_0(%arg0: i32, %arg1: i32) -> (i32, i32, i32) {
    %c0_i32 = arith.constant 0 : i32
    %c0_i32_0 = arith.constant 0 : i32
    return %arg0, %c0_i32, %arg1 : i32, i32, i32
  }
  func.func @transform_1(%arg0: i32, %arg1: i32) -> (i32, i32) {
    %c0_i32 = arith.constant 0 : i32
    %c0_i32_0 = arith.constant 0 : i32
    %c0_i32_1 = arith.constant 0 : i32
    return %c0_i32, %c0_i32_0 : i32, i32
  }
  func.func @transform_2(%arg0: i32, %arg1: i32) -> (i32, i32) {
    %c0_i32 = arith.constant 0 : i32
    %c0_i32_0 = arith.constant 0 : i32
    %c0_i32_1 = arith.constant 0 : i32
    return %c0_i32, %c0_i32_0 : i32, i32
  }
  func.func @transform_3(%arg0: i32, %arg1: i32) -> (i32, i32, i32) {
    %c0_i32 = arith.constant 0 : i32
    %c0_i32_0 = arith.constant 0 : i32
    return %arg0, %c0_i32, %arg1 : i32, i32, i32
  }
}

</mosaic_0001>

<llo_original>
// kernel: tpu_custom_call.1
$region0: #{tpu_custom_call.1}
  #allocation0 [shape = 'u32[]', space=smem, size = 0x4, offset = 0x4, fixed_abs, tag = 'smem constant byte address 0x4 - core index']
  #allocation1 [shape = 'u32[144,128]{1,0:T(1,128)}', space=vmem, size = 0x12000, scoped, tag = 'internal scratch']
  %s0 = inlined_call_operand.vmem [shape: f32[2,12,16], index: 0, kind: input, shape index: {}]
  %s1 = inlined_call_operand.vmem [shape: f32[24,12], index: 1, kind: input, shape index: {}]
  %s2 = inlined_call_operand.vmem [shape: f32[24,1], index: 2, kind: input, shape index: {}]
  %s3 = inlined_call_operand.vmem [shape: f32[2,24,16], index: 3, kind: output, shape index: {}]
  %s4 = sld [smem:[#allocation0]]
  $region45: #{tpu_custom_call.1} parent=0
    _
  %s6 = ssub.s32 1, %s4
  %s7 = scalar_select 0, %s6, %s4
  loop: start=0, step=1, limit=4
  $region2: #{tpu_custom_call.1} parent=0 // loop_pre_header
    _
  $region3: #{tpu_custom_call.1} parent=0 // loop_header
    %s9 = sphi 0, %s13
    %p10 = scmp.ge.s32.totalorder %s9, 4
    %s16 = sphi 0, %s28
    %s17 = sphi 0, %s24
    %s18 = sphi 0, %s16
    %s19 = sphi 0, %s17
    %s20 = sphi 0, %s18
    %s21 = sphi 0, %s19
    %s33 = sphi 0, %s35
    %s36 = sphi 0, %s33
    %s37 = sphi 0, %s36
    %s53 = sphi 0, %s37
    %s57 = sphi 0, %s57
    %s59 = sphi 0, %s57
    %s60 = sphi 0, %s59
    %s74 = sphi 0, %s60
    %s78 = sphi 0, %s78
    %s80 = sphi 0, %s78
    %s81 = sphi 0, %s80
    %s95 = sphi 0, %s81
    %s103 = sphi 0, %s105
    %s106 = sphi 0, %s103
    %s107 = sphi 0, %s106
    %s123 = sphi 0, %s107
  $region4: #{tpu_custom_call.1} parent=0 // loop_header_branch
    %12 = sbr.rel (%p10) target = $region8
  $region5: #{tpu_custom_call.1} parent=0 // loop_body
    %s14 = ssub.s32 %s9, 1
    %s15 = ssub.s32 %s9, 2
    %s22 = sadd.s32 1, %s17
    %p23 = scmp.ge.s32.totalorder %s22, 1
    %s24 = scalar_select %p23, 0, %s22
    %s25 = sadd.s32 1, %s16
    %s26 = scalar_select %p23, %s25, %s16
    %p27 = scmp.ge.s32.totalorder %s26, 2
    %s28 = scalar_select %p27, 0, %s26
    %s29 = ssub.s32 %s16, %s28
    %s30 = ssub.s32 %s17, %s24
    %s31 = sor.u32 %s29, %s30
    %p32 = scmp.eq.s32.totalorder %s31, 0
    %s34 = sadd.s32 %s33, 1
    %s35 = scalar_select %p32, %s33, %s34
    %p38 = pneg %p32
    %p39 = scmp.eq.s32.totalorder %s9, 1
    %p40 = por %p38, %p39
    %p41 = scmp.ne.s32.totalorder %s33, %s36
    %p42 = scmp.eq.s32.totalorder %s9, 0
    %p43 = por %p41, %p42
    %p44 = scmp.ne.s32.totalorder %s33, %s36
    %p45 = scmp.eq.s32.totalorder %s14, 1
    %p46 = por %p44, %p45
    %p47 = scmp.ne.s32.totalorder %s36, %s37
    %p48 = scmp.eq.s32.totalorder %s14, 0
    %p49 = por %p47, %p48
    %p50 = scmp.ne.s32.totalorder %s36, %s37
    %p51 = scmp.eq.s32.totalorder %s15, 1
    %p52 = por %p50, %p51
    %p54 = scmp.ne.s32.totalorder %s37, %s53
    %p55 = scmp.eq.s32.totalorder %s15, 0
    %p56 = por %p54, %p55
    %s58 = sadd.s32 %s57, 1
    %p61 = scmp.eq.s32.totalorder %s9, 1
    %p62 = scmp.ne.s32.totalorder %s57, %s59
    %p63 = scmp.eq.s32.totalorder %s9, 0
    %p64 = por %p62, %p63
    %p65 = scmp.ne.s32.totalorder %s57, %s59
    %p66 = scmp.eq.s32.totalorder %s14, 1
    %p67 = por %p65, %p66
    %p68 = scmp.ne.s32.totalorder %s59, %s60
    %p69 = scmp.eq.s32.totalorder %s14, 0
    %p70 = por %p68, %p69
    %p71 = scmp.ne.s32.totalorder %s59, %s60
    %p72 = scmp.eq.s32.totalorder %s15, 1
    %p73 = por %p71, %p72
    %p75 = scmp.ne.s32.totalorder %s60, %s74
    %p76 = scmp.eq.s32.totalorder %s15, 0
    %p77 = por %p75, %p76
    %s79 = sadd.s32 %s78, 1
    %p82 = scmp.eq.s32.totalorder %s9, 1
    %p83 = scmp.ne.s32.totalorder %s78, %s80
    %p84 = scmp.eq.s32.totalorder %s9, 0
    %p85 = por %p83, %p84
    %p86 = scmp.ne.s32.totalorder %s78, %s80
    %p87 = scmp.eq.s32.totalorder %s14, 1
    %p88 = por %p86, %p87
    %p89 = scmp.ne.s32.totalorder %s80, %s81
    %p90 = scmp.eq.s32.totalorder %s14, 0
    %p91 = por %p89, %p90
    %p92 = scmp.ne.s32.totalorder %s80, %s81
    %p93 = scmp.eq.s32.totalorder %s15, 1
    %p94 = por %p92, %p93
    %p96 = scmp.ne.s32.totalorder %s81, %s95
    %p97 = scmp.eq.s32.totalorder %s15, 0
    %p98 = por %p96, %p97
    %s99 = ssub.s32 %s16, %s28
    %s100 = ssub.s32 %s17, %s24
    %s101 = sor.u32 %s99, %s100
    %p102 = scmp.eq.s32.totalorder %s101, 0
    %s104 = sadd.s32 %s103, 1
    %s105 = scalar_select %p102, %s103, %s104
    %p108 = pneg %p102
    %p109 = scmp.eq.s32.totalorder %s9, 1
    %p110 = por %p108, %p109
    %p111 = scmp.ne.s32.totalorder %s103, %s106
    %p112 = scmp.eq.s32.totalorder %s9, 0
    %p113 = por %p111, %p112
    %p114 = scmp.ne.s32.totalorder %s103, %s106
    %p115 = scmp.eq.s32.totalorder %s14, 1
    %p116 = por %p114, %p115
    %p117 = scmp.ne.s32.totalorder %s106, %s107
    %p118 = scmp.eq.s32.totalorder %s14, 0
    %p119 = por %p117, %p118
    %p120 = scmp.ne.s32.totalorder %s106, %s107
    %p121 = scmp.eq.s32.totalorder %s15, 1
    %p122 = por %p120, %p121
    %p124 = scmp.ne.s32.totalorder %s107, %s123
    %p125 = scmp.eq.s32.totalorder %s15, 0
    %p126 = por %p124, %p125
    %p127 = scmp.le.s32.totalorder 1, %s9
    %p128 = scmp.lt.s32.totalorder %s9, 3
    %p129 = pnand %p127, %p128
    %p130 = pneg %p129
    // Predicated region
    $region9: #{tpu_custom_call.1} parent=5 // pred_check
      _
    $region10: #{tpu_custom_call.1} parent=5 // pred_check_branch
      %132 = sbr.rel (%p129) target = $region12
    $region11: #{tpu_custom_call.1} parent=5 // pred_region
      %s133 = ssub.s32 %s9, 1
      // Predicated region
      $region13: #{tpu_custom_call.1} parent=11 // pred_check
        %p134 = pneg %p70
      $region14: #{tpu_custom_call.1} parent=11 // pred_check_branch
        %136 = sbr.rel (%p134) target = $region16
      $region15: #{tpu_custom_call.1} parent=11 // pred_region
        _
      $region16: #{tpu_custom_call.1} parent=11 // pred_fallthru
        _
      // Predicated region
      $region17: #{tpu_custom_call.1} parent=11 // pred_check
        %p137 = pneg %p91
      $region18: #{tpu_custom_call.1} parent=11 // pred_check_branch
        %139 = sbr.rel (%p137) target = $region20
      $region19: #{tpu_custom_call.1} parent=11 // pred_region
        _
      $region20: #{tpu_custom_call.1} parent=11 // pred_fallthru
        _
    $region12: #{tpu_custom_call.1} parent=5 // pred_fallthru
      _
    %p140 = scmp.lt.s32.totalorder %s9, 2
    // Predicated region
    $region21: #{tpu_custom_call.1} parent=5 // pred_check
      %p141 = pneg %p140
    $region22: #{tpu_custom_call.1} parent=5 // pred_check_branch
      %143 = sbr.rel (%p141) target = $region24
    $region23: #{tpu_custom_call.1} parent=5 // pred_region
      // Predicated region
      $region25: #{tpu_custom_call.1} parent=23 // pred_check
        %p144 = pneg %p43
      $region26: #{tpu_custom_call.1} parent=23 // pred_check_branch
        %146 = sbr.rel (%p144) target = $region28
      $region27: #{tpu_custom_call.1} parent=23 // pred_region
        %p147 = scmp.lt.s32.totalorder %s16, 1
        %s148 = scalar_select %p147, %s16, 1
        %p149 = scmp.lt.s32.totalorder %s17, 0
        %s150 = scalar_select %p149, %s17, 0
        %s151 = smul.addr %s148, 2
        %s152 = sadd.s32 %s150, %s151
        %s153 = smul.addr %s152, 8
        %s154 = scalar_lea.vmem %s0, %s153
      $region28: #{tpu_custom_call.1} parent=23 // pred_fallthru
        _
    $region24: #{tpu_custom_call.1} parent=5 // pred_fallthru
      _
    %p155 = scmp.le.s32.totalorder 1, %s9
    %p156 = scmp.lt.s32.totalorder %s9, 3
    %p157 = pnand %p155, %p156
    %p158 = pneg %p157
    // Predicated region
    $region29: #{tpu_custom_call.1} parent=5 // pred_check
      _
    $region30: #{tpu_custom_call.1} parent=5 // pred_check_branch
      %160 = sbr.rel (%p157) target = $region32
    $region31: #{tpu_custom_call.1} parent=5 // pred_region
      %s161 = ssub.s32 %s9, 1
      %p162 = scmp.lt.s32.totalorder %s18, 1
      %s163 = scalar_select %p162, %s18, 1
      %p164 = scmp.lt.s32.totalorder %s19, 0
      %s165 = scalar_select %p164, %s19, 0
      %s166 = smul.addr %s163, 2
      %s167 = sadd.s32 %s165, %s166
      %s168 = smul.addr %s167, 8
      %s169 = scalar_lea.vmem %s0, %s168
      %p170 = pneg %p49
      %p171 = pneg %p46
      %p172 = pneg %p70
      %p173 = pneg %p67
      %p174 = pneg %p91
      %p175 = pneg %p88
      %p176 = pneg %p119
      %p177 = pneg %p116
      %p178 = scmp.lt.s32.totalorder %s18, 1
      %s179 = scalar_select %p178, %s18, 1
      %p180 = scmp.lt.s32.totalorder %s19, 0
      %s181 = scalar_select %p180, %s19, 0
      %s182 = smul.addr %s179, 3
      %s183 = sadd.s32 %s181, %s182
      %s184 = smul.addr %s183, 8
      %s185 = scalar_lea.vmem %s3, %s184
      %p186 = scmp.lt.s32.totalorder %s18, 1
      %s187 = scalar_select %p186, %s18, 1
      %p188 = scmp.lt.s32.totalorder %s19, 0
      %s189 = scalar_select %p188, %s19, 0
      %s190 = smul.addr %s187, 2
      %s191 = sadd.s32 %s189, %s190
      %s192 = smul.addr %s191, 8
      %s193 = scalar_lea.vmem %s0, %s192
      %p194 = scmp.lt.s32.totalorder %s18, 1
      %s195 = scalar_select %p194, %s18, 1
      %p196 = scmp.lt.s32.totalorder %s19, 0
      %s197 = scalar_select %p196, %s19, 0
      %s198 = smul.addr %s195, 3
      %s199 = sadd.s32 %s197, %s198
      %s200 = smul.addr %s199, 8
      %s201 = scalar_lea.vmem %s3, %s200
      %v202 = vld [vmem:[%s1] sm:$0xff]
      %v203 = vld [vmem:[%s1 + $0x8] sm:$0xff]
      %v204 = vld [vmem:[%s1 + $0x10] sm:$0xff]
      %v205 = vld [vmem:[%s193] sm:$0xff]
      %v206 = vld [vmem:[%s193 + $0x8] sm:$0xf]
      %v207 = vld [vmem:[%s2] sm:$0xff]
      %v208 = vld [vmem:[%s2 + $0x8] sm:$0xff]
      %v209 = vld [vmem:[%s2 + $0x10] sm:$0xff]
      %211 = vset.pattern.permute.xlu0 0
      %212 = vperm.xlu0 %211, %v207
      %v213 = vpop.permute.xlu0 %212
      %216 = vset.pattern.permute.xlu0 0
      %217 = vperm.xlu0 %216, %v208
      %v218 = vpop.permute.xlu0 %217
      %221 = vset.pattern.permute.xlu0 0
      %222 = vperm.xlu0 %221, %v209
      %v223 = vpop.permute.xlu0 %222
      %vm225 = vcmask 97280
      %v227 = vsel %vm225, %v202, 0
      %v230 = vsel %vm225, %v203, 0
      %v233 = vsel %vm225, %v204, 0
      %vm235 = vcmask 1043456
      %v237 = vsel %vm235, %v206, 0
      %239 = vmatprep.subr.mxu0 0.0
      %240 = vmatpush1.msra.mxu0 %v205
      %241 = vmatprep.subr.mxu0 0.0
      %242 = vmatpush1.msra.mxu0 %v237
      %243 = vmatprep.subr.mxu0 0.0
      %244 = vmatpush1.msra.mxu0 0.0
      %245 = vmatprep.subr.mxu0 0.0
      %246 = vmatpush1.msra.mxu0 0.0
      %247 = vmatprep.subr.mxu0 0.0
      %248 = vmatpush1.msra.mxu0 0.0
      %249 = vmatprep.subr.mxu0 0.0
      %250 = vmatpush1.msra.mxu0 0.0
      %251 = vmatprep.subr.mxu0 0.0
      %252 = vmatpush1.msra.mxu0 0.0
      %253 = vmatprep.subr.mxu0 0.0
      %254 = vmatpush1.msra.mxu0 0.0
      %255 = vmatprep.subr.mxu0 0.0
      %256 = vmatpush1.msra.mxu0 0.0
      %257 = vmatprep.subr.mxu0 0.0
      %258 = vmatpush1.msra.mxu0 0.0
      %259 = vmatprep.subr.mxu0 0.0
      %260 = vmatpush1.msra.mxu0 0.0
      %261 = vmatprep.subr.mxu0 0.0
      %262 = vmatpush1.msra.mxu0 0.0
      %263 = vmatprep.subr.mxu0 0.0
      %264 = vmatpush1.msra.mxu0 0.0
      %265 = vmatprep.subr.mxu0 0.0
      %266 = vmatpush1.msra.mxu0 0.0
      %267 = vmatprep.subr.mxu0 0.0
      %268 = vmatpush1.msra.mxu0 0.0
      %269 = vmatprep.subr.mxu0 0.0
      %270 = vmatpush1.msra.mxu0 0.0
      %271 = vmatprep.subr.mxu0 0.0
      %272 = vmatpush1.msra.mxu0 0.0
      %273 = vmatprep.subr.mxu0 0.0
      %274 = vmatpush1.msra.mxu0 0.0
      %275 = vmatprep.subr.mxu0 0.0
      %276 = vmatpush1.msra.mxu0 0.0
      %277 = vmatprep.subr.mxu0 0.0
      %278 = vmatpush1.msra.mxu0 0.0
      %279 = vmatprep.subr.mxu0 0.0
      %280 = vmatpush1.msra.mxu0 0.0
      %281 = vmatprep.subr.mxu0 0.0
      %282 = vmatpush1.msra.mxu0 0.0
      %283 = vmatprep.subr.mxu0 0.0
      %284 = vmatpush1.msra.mxu0 0.0
      %285 = vmatprep.subr.mxu0 0.0
      %286 = vmatpush1.msra.mxu0 0.0
      %287 = vmatprep.subr.mxu0 0.0
      %288 = vmatpush1.msra.mxu0 0.0
      %289 = vmatprep.subr.mxu0 0.0
      %290 = vmatpush1.msra.mxu0 0.0
      %291 = vmatprep.subr.mxu0 0.0
      %292 = vmatpush1.msra.mxu0 0.0
      %293 = vmatprep.subr.mxu0 0.0
      %294 = vmatpush1.msra.mxu0 0.0
      %295 = vmatprep.subr.mxu0 0.0
      %296 = vmatpush1.msra.mxu0 0.0
      %297 = vmatprep.subr.mxu0 0.0
      %298 = vmatpush1.msra.mxu0 0.0
      %299 = vmatprep.subr.mxu0 0.0
      %300 = vmatpush1.msra.mxu0 0.0
      %301 = vmatprep.subr.mxu0 0.0
      %302 = vmatpush1.msra.mxu0 0.0
      %303 = vmatprep.mubr.f32.mxu0 0.0
      %304 = vmatmul.mubr.f32.gmra.mrb[0].mxu0 %v227
      %v305 = vpop.f32.mrb[0].mxu0
      %v306 = vadd.f32 %v213, %v305
      %v307 = vpop.f32.mrb[0].mxu0
      %308 = vmatprep.mubr.f32.mxu0 0.0
      %309 = vmatmul.mubr.f32.gmra.mrb[0].mxu0 %v230
      %v310 = vpop.f32.mrb[0].mxu0
      %v311 = vadd.f32 %v218, %v310
      %v312 = vpop.f32.mrb[0].mxu0
      %313 = vmatprep.mubr.f32.mxu0 0.0
      %314 = vmatmul.mubr.f32.gmra.mrb[0].mxu0 %v233
      %v315 = vpop.f32.mrb[0].mxu0
      %v316 = vadd.f32 %v223, %v315
      %v317 = vpop.f32.mrb[0].mxu0
      %318 = vdwg.mxu0
      %vm319 = vcmask 130048
      %320 = vst.msk [vmem:[%s201] sm:$0xff] %vm319, %v306
      %321 = vst.msk [vmem:[%s201 + $0x8] sm:$0xff] %vm319, %v311
      %322 = vst.msk [vmem:[%s201 + $0x10] sm:$0xff] %vm319, %v316
      %p323 = scmp.lt.s32.totalorder %s18, 1
      %s324 = scalar_select %p323, %s18, 1
      %p325 = scmp.lt.s32.totalorder %s19, 0
      %s326 = scalar_select %p325, %s19, 0
      %s327 = smul.addr %s324, 3
      %s328 = sadd.s32 %s326, %s327
      %s329 = smul.addr %s328, 8
      %s330 = scalar_lea.vmem %s3, %s329
      // Predicated region
      $region33: #{tpu_custom_call.1} parent=31 // pred_check
        %p331 = pneg %p116
      $region34: #{tpu_custom_call.1} parent=31 // pred_check_branch
        %333 = sbr.rel (%p331) target = $region36
      $region35: #{tpu_custom_call.1} parent=31 // pred_region
        _
      $region36: #{tpu_custom_call.1} parent=31 // pred_fallthru
        _
    $region32: #{tpu_custom_call.1} parent=5 // pred_fallthru
      _
    %p334 = scmp.le.s32.totalorder 2, %s9
    // Predicated region
    $region37: #{tpu_custom_call.1} parent=5 // pred_check
      %p335 = pneg %p334
    $region38: #{tpu_custom_call.1} parent=5 // pred_check_branch
      %337 = sbr.rel (%p335) target = $region40
    $region39: #{tpu_custom_call.1} parent=5 // pred_region
      %s338 = ssub.s32 %s9, 2
      // Predicated region
      $region41: #{tpu_custom_call.1} parent=39 // pred_check
        %p339 = pneg %p122
      $region42: #{tpu_custom_call.1} parent=39 // pred_check_branch
        %341 = sbr.rel (%p339) target = $region44
      $region43: #{tpu_custom_call.1} parent=39 // pred_region
        %p342 = scmp.lt.s32.totalorder %s20, 1
        %s343 = scalar_select %p342, %s20, 1
        %p344 = scmp.lt.s32.totalorder %s21, 0
        %s345 = scalar_select %p344, %s21, 0
        %s346 = smul.addr %s343, 3
        %s347 = sadd.s32 %s345, %s346
        %s348 = smul.addr %s347, 8
        %s349 = scalar_lea.vmem %s3, %s348
      $region44: #{tpu_custom_call.1} parent=39 // pred_fallthru
        _
    $region40: #{tpu_custom_call.1} parent=5 // pred_fallthru
      _
  $region6: #{tpu_custom_call.1} parent=0 // loop_footer
    %s13 = sadd.s32 1, %s9
  $region7: #{tpu_custom_call.1} parent=0 // loop_footer_branch
    %8 = sbr.rel target = $region3
  $region8: #{tpu_custom_call.1} parent=0 // loop_exit
    _

</llo_original>
